<compile_context>
chip_gen: v7x
topology: tpu7x:2x2x1
jax: 0.10.0
libtpu: 0.0.40
codegen_flags: <defaults>
</compile_context>

<pallas_src>
import jax
import jax.numpy as jnp
from jax import lax
from jax.experimental import pallas as pl
from jax.experimental.pallas import tpu as pltpu

DEC_LAYERS = 16
OUT_HW = 5                              # output_size = (5, 5)
FC_OUT = DEC_LAYERS * OUT_HW * OUT_HW   # 400
DEC_FLAT = OUT_HW * OUT_HW              # 25

K_PAD = 408     # 400 fc outputs + 1 bias column, rounded up to a multiple of 8
N_PAD = 128     # output lane dim, padded 25 -> 128 (lane-dense stores)
TB_MAX = 1024   # max batch-tile rows per grid step


def _round_up(a, b):
    return ((a + b - 1) // b) * b


# ----------------------------------------------------------------------------
# Pallas kernel: fused  ReLU(x @ Wfc + bfc) @ M   (all dims padded/aligned)
# ----------------------------------------------------------------------------
def _decoder_kernel(x_ref, wfc_ref, bfc_ref, m_ref, out_ref):
    # fc: bf16 x bf16 on the MXU, f32 accumulation.
    xb = x_ref[...].astype(jnp.bfloat16)
    h = jnp.dot(xb, wfc_ref[...], preferred_element_type=jnp.float32)
    # bias + ReLU epilogue in f32 on the VPU.  Column FC_OUT of bfc is 1.0, so
    # it survives the ReLU and carries the deconv bias through the 2nd matmul.
    h = jnp.maximum(h + bfc_ref[...], 0.0)            # (TB, K_PAD) f32
    # TODO(synk): dropout is eval-mode identity (training would need
    # pltpu.prng_seed / prng_random_bits masking here).
    # conv-transpose (+ its bias) as a second MXU pass against padded M.
    out_ref[...] = jnp.dot(h.astype(jnp.bfloat16), m_ref[...],
                           preferred_element_type=jnp.float32)


# ----------------------------------------------------------------------------
# One-time parameter preparation (hoisted out of the per-call path)
# ----------------------------------------------------------------------------
def _build_deconv_matrix(w_dec):
    """Build M (400, 25) s.t. flat(x_img) @ M == ConvTranspose2d(x_img) (no bias).

    w_dec: (in_ch=16, out_ch=1, 3, 3) PyTorch ConvTranspose2d weight.
    y[oh, ow] = sum_{c,h,w} x[c,h,w] * W[c,0,oh-h+1,ow-w+1]  (valid taps only)
    """
    wl = w_dec[:, 0]                                   # (16, 3, 3)
    h = jnp.arange(OUT_HW)
    oh = jnp.arange(OUT_HW)
    kh = oh[None, :] - h[:, None] + 1                  # (h, oh)
    valid_h = (kh >= 0) & (kh < 3)
    kh_c = jnp.clip(kh, 0, 2)
    kw_c = kh_c                                        # same pattern for (w, ow)
    valid_w = valid_h
    m = wl[:, kh_c, :][:, :, :, kw_c]                  # (c, h, oh, w, ow)
    m = m * (valid_h[None, :, :, None, None] & valid_w[None, None, None, :, :])
    m = jnp.transpose(m, (0, 1, 3, 2, 4))              # (c, h, w, oh, ow)
    return m.reshape(FC_OUT, DEC_FLAT)                 # (400, 25)


def prepare_decoder_params(w_fc, b_fc, w_dec, b_dec):
    """Pad/fold the module parameters once; returns kernel-ready arrays.

    w_fc: (E, 400) -- note: already transposed w.r.t. torch's nn.Linear.weight.
    """
    E = w_fc.shape[0]
    b_dec_s = jnp.asarray(b_dec, jnp.float32).reshape(())

    m = _build_deconv_matrix(jnp.asarray(w_dec, jnp.float32))          # (400, 25)
    m_pad = jnp.zeros((K_PAD, N_PAD), jnp.float32)
    m_pad = m_pad.at[:FC_OUT, :DEC_FLAT].set(m)
    # Deconv bias row: pairs with the constant-1 column of bfc_pad below.
    m_pad = m_pad.at[FC_OUT, :DEC_FLAT].set(b_dec_s)
    m_pad = m_pad.astype(jnp.bfloat16)                                 # (408, 128)

    wfc_pad = jnp.zeros((E, K_PAD), jnp.float32)
    wfc_pad = wfc_pad.at[:, :FC_OUT].set(jnp.asarray(w_fc, jnp.float32))
    wfc_pad = wfc_pad.astype(jnp.bfloat16)                             # (E, 408)

    bfc_pad = jnp.zeros((1, K_PAD), jnp.float32)
    bfc_pad = bfc_pad.at[0, :FC_OUT].set(jnp.asarray(b_fc, jnp.float32))
    bfc_pad = bfc_pad.at[0, FC_OUT].set(1.0)       # survives ReLU -> carries b_dec
    # columns FC_OUT+1 .. K_PAD-1 stay zero so padded lanes never leak.
    return wfc_pad, bfc_pad, m_pad


# ----------------------------------------------------------------------------
# Tile selection (static, per batch size)
# ----------------------------------------------------------------------------
def _choose_tiles(B):
    Bp = max(8, _round_up(B, 8))              # clean full-sublane vectors
    if Bp >= 16:
        # >= 2 grid steps so both v7x TensorCores get work; cap tile at TB_MAX.
        tb = min(TB_MAX, _round_up(-(-Bp // 2), 8))
    else:
        tb = Bp
    Bp = _round_up(Bp, tb)
    return tb, Bp


# ----------------------------------------------------------------------------
# Jitted forward wrapper
# ----------------------------------------------------------------------------
@jax.jit
def cnn_decoder_forward(x, wfc_pad, bfc_pad, m_pad):
    """x: (B, E) float32 -> (B, 1, 5, 5) float32 (NCHW)."""
    B, E = x.shape
    TB, Bp = _choose_tiles(B)
    xp = x if Bp == B else jnp.zeros((Bp, E), x.dtype).at[:B].set(x)

    cost = pl.CostEstimate(
        flops=2 * Bp * (E * K_PAD + K_PAD * N_PAD),
        transcendentals=0,
        bytes_accessed=(4 * Bp * E                      # x (f32)
                        + 2 * (E * K_PAD + K_PAD * N_PAD)  # bf16 weights
                        + 4 * K_PAD                     # bfc (f32)
                        + 4 * Bp * N_PAD),              # out (f32)
    )

    out_pad = pl.pallas_call(
        _decoder_kernel,
        out_shape=jax.ShapeDtypeStruct((Bp, N_PAD), jnp.float32),
        grid=(Bp // TB,),
        in_specs=[
            pl.BlockSpec((TB, E), lambda i: (i, 0)),        # activations: tiled
            pl.BlockSpec((E, K_PAD), lambda i: (0, 0)),     # weights: resident
            pl.BlockSpec((1, K_PAD), lambda i: (0, 0)),
            pl.BlockSpec((K_PAD, N_PAD), lambda i: (0, 0)),
        ],
        out_specs=pl.BlockSpec((TB, N_PAD), lambda i: (i, 0)),
        compiler_params=pltpu.CompilerParams(
            dimension_semantics=("parallel",)),             # megacore on v7x
        cost_estimate=cost,
    )(xp, wfc_pad, bfc_pad, m_pad)

    # Slice back to the 25 real output columns (deconv bias already folded in).
    out = out_pad[:B, :DEC_FLAT]
    return out.reshape(B, 1, OUT_HW, OUT_HW)


# ----------------------------------------------------------------------------
# Pure-JAX f32 reference (correctness sanity check)
# ----------------------------------------------------------------------------
def _reference_forward(x, w_fc, b_fc, w_dec, b_dec):
    h = jnp.maximum(x @ w_fc + b_fc, 0.0)                        # (B, 400)
    h = h.reshape(x.shape[0], DEC_LAYERS, OUT_HW, OUT_HW)        # (B, 16, 5, 5)
    # ConvTranspose2d(s=1, p=1, k=3) == Conv2d with flipped kernel, pad=1
    w_conv = jnp.flip(w_dec, axis=(2, 3)).transpose(1, 0, 2, 3)  # (1, 16, 3, 3)
    y = lax.conv_general_dilated(
        h, w_conv, window_strides=(1, 1), padding=((1, 1), (1, 1)),
        dimension_numbers=("NCHW", "OIHW", "NCHW"))
    return y + b_dec.reshape(1, 1, 1, 1)


if __name__ == "__main__":
    B, E = 2, 32   # batch=2, embedding_dim=32

    key = jax.random.PRNGKey(0)
    k1, k2, k3, k4, k5 = jax.random.split(key, 5)

    # Deterministic synthetic parameters (shapes from the module's __init__).
    # w_fc is stored (E, 400), i.e. nn.Linear.weight.T.
    x = jax.random.normal(k1, (B, E), dtype=jnp.float32)
    w_fc = jax.random.normal(k2, (E, FC_OUT), dtype=jnp.float32) * (1.0 / jnp.sqrt(E))
    b_fc = jax.random.normal(k3, (FC_OUT,), dtype=jnp.float32) * 0.01
    w_dec = jax.random.normal(k4, (DEC_LAYERS, 1, 3, 3), dtype=jnp.float32) * 0.1
    b_dec = jax.random.normal(k5, (1,), dtype=jnp.float32) * 0.01

    # One-time parameter prep (M build + padding + bias folding + bf16 cast).
    params = jax.block_until_ready(
        prepare_decoder_params(w_fc, b_fc, w_dec, b_dec))

    out = cnn_decoder_forward(x, *params)
    out = jax.block_until_ready(out)

    ref = _reference_forward(x, w_fc, b_fc, w_dec, b_dec)
    assert out.shape == (B, 1, OUT_HW, OUT_HW), out.shape
    # bf16 weights/activations (f32 accumulation) => loosened tolerance.
    max_err = float(jnp.max(jnp.abs(out - ref)))
    assert jnp.allclose(out, ref, rtol=5e-2, atol=5e-2), max_err

    print("KERNEL_OK")
</pallas_src>

<mosaic_0001>
module attributes {stable_mosaic.version = 11 : i64} {
  func.func @_decoder_kernel(%arg0: i32, %arg1: memref<8x32xf32, #tpu.memory_space<vmem>>, %arg2: memref<32x408xbf16, #tpu.memory_space<vmem>>, %arg3: memref<1x408xf32, #tpu.memory_space<vmem>>, %arg4: memref<408x128xbf16, #tpu.memory_space<vmem>>, %arg5: memref<8x128xf32, #tpu.memory_space<vmem>>) attributes {dimension_semantics = [#tpu.dimension_semantics<parallel>], iteration_bounds = array<i64: 1>, scalar_prefetch = 0 : i64, scratch_operands = 0 : i64, tpu.core_type = #tpu.core_type<tc>, window_params = [{transform_indices = @transform_0, window_bounds = array<i64: 8, 32>}, {pipeline_mode = #tpu.pipeline_mode<synchronous>, transform_indices = @transform_1, window_bounds = array<i64: 32, 408>}, {pipeline_mode = #tpu.pipeline_mode<synchronous>, transform_indices = @transform_2, window_bounds = array<i64: 1, 408>}, {pipeline_mode = #tpu.pipeline_mode<synchronous>, transform_indices = @transform_3, window_bounds = array<i64: 408, 128>}, {transform_indices = @transform_4, window_bounds = array<i64: 8, 128>}]} {
    %c0 = arith.constant 0 : index
    %c0_0 = arith.constant 0 : index
    %0 = vector.load %arg1[%c0, %c0_0] : memref<8x32xf32, #tpu.memory_space<vmem>>, vector<8x32xf32>
    %1 = arith.truncf %0 : vector<8x32xf32> to vector<8x32xbf16>
    %c0_1 = arith.constant 0 : index
    %c0_2 = arith.constant 0 : index
    %2 = vector.load %arg2[%c0_1, %c0_2] : memref<32x408xbf16, #tpu.memory_space<vmem>>, vector<32x408xbf16>
    %cst = arith.constant dense<0.000000e+00> : vector<8x408xf32>
    %3 = tpu.matmul %1, %2, %cst {dimension_numbers = #tpu.dot_dimension_numbers<[1], [0], [0], [1], [0, 0, 1, 1], [], []>} : vector<8x32xbf16>, vector<32x408xbf16>, vector<8x408xf32> -> vector<8x408xf32>
    %c0_3 = arith.constant 0 : index
    %c0_4 = arith.constant 0 : index
    %4 = vector.load %arg3[%c0_3, %c0_4] : memref<1x408xf32, #tpu.memory_space<vmem>>, vector<1x408xf32>
    %5 = vector.broadcast %4 : vector<1x408xf32> to vector<8x408xf32>
    %6 = arith.addf %3, %5 : vector<8x408xf32>
    %cst_5 = arith.constant 0.000000e+00 : f32
    %7 = vector.broadcast %cst_5 : f32 to vector<8x408xf32>
    %8 = arith.maximumf %6, %7 : vector<8x408xf32>
    %9 = arith.truncf %8 : vector<8x408xf32> to vector<8x408xbf16>
    %c0_6 = arith.constant 0 : index
    %c0_7 = arith.constant 0 : index
    %10 = vector.load %arg4[%c0_6, %c0_7] : memref<408x128xbf16, #tpu.memory_space<vmem>>, vector<408x128xbf16>
    %cst_8 = arith.constant dense<0.000000e+00> : vector<8x128xf32>
    %11 = tpu.matmul %9, %10, %cst_8 {dimension_numbers = #tpu.dot_dimension_numbers<[1], [0], [0], [1], [0, 0, 1, 1], [], []>} : vector<8x408xbf16>, vector<408x128xbf16>, vector<8x128xf32> -> vector<8x128xf32>
    %c0_9 = arith.constant 0 : index
    %c0_10 = arith.constant 0 : index
    %12 = vector.load %arg5[%c0_9, %c0_10] : memref<8x128xf32, #tpu.memory_space<vmem>>, vector<8x128xf32>
    tpu.vector_store %arg5[%c0_9, %c0_10], %11 {strides = array<i32>} : memref<8x128xf32, #tpu.memory_space<vmem>>, vector<8x128xf32>,
    return
  }
  func.func @transform_0(%arg0: i32) -> (i32, i32) {
    %c0_i32 = arith.constant 0 : i32
    %c0_i32_0 = arith.constant 0 : i32
    return %arg0, %c0_i32 : i32, i32
  }
  func.func @transform_1(%arg0: i32) -> (i32, i32) {
    %c0_i32 = arith.constant 0 : i32
    %c0_i32_0 = arith.constant 0 : i32
    %c0_i32_1 = arith.constant 0 : i32
    return %c0_i32, %c0_i32_0 : i32, i32
  }
  func.func @transform_2(%arg0: i32) -> (i32, i32) {
    %c0_i32 = arith.constant 0 : i32
    %c0_i32_0 = arith.constant 0 : i32
    %c0_i32_1 = arith.constant 0 : i32
    return %c0_i32, %c0_i32_0 : i32, i32
  }
  func.func @transform_3(%arg0: i32) -> (i32, i32) {
    %c0_i32 = arith.constant 0 : i32
    %c0_i32_0 = arith.constant 0 : i32
    %c0_i32_1 = arith.constant 0 : i32
    return %c0_i32, %c0_i32_0 : i32, i32
  }
  func.func @transform_4(%arg0: i32) -> (i32, i32) {
    %c0_i32 = arith.constant 0 : i32
    %c0_i32_0 = arith.constant 0 : i32
    return %arg0, %c0_i32 : i32, i32
  }
}

</mosaic_0001>

<llo_original>
// kernel: cnn_decoder_forward.1
$region0: #{cnn_decoder_forward.1}
  #allocation0 [shape = 'u32[]', space=smem, size = 0x4, offset = 0x4, fixed_abs, tag = 'smem constant byte address 0x4 - core index']
  #allocation1 [shape = 'u32[144,128]{1,0:T(1,128)}', space=vmem, size = 0x12000, scoped, tag = 'internal scratch']
  %s0 = inlined_call_operand.vmem [shape: f32[8,32], index: 0, kind: input, shape index: {}]
  %s1 = inlined_call_operand.hbm [shape: bf16[32,408], index: 1, kind: input, shape index: {}]
  %s2 = inlined_call_operand.vmem [shape: f32[1,408], index: 2, kind: input, shape index: {}]
  %s3 = inlined_call_operand.hbm [shape: bf16[408,128], index: 3, kind: input, shape index: {}]
  %s4 = inlined_call_operand.vmem [shape: f32[8,128], index: 4, kind: output, shape index: {}]
  %s5 = sld [smem:[#allocation0]]
  $region34: #{cnn_decoder_forward.1} parent=0
    _
  %s7 = ssub.s32 1, %s5
  %s8 = scalar_select 0, %s7, %s5
  $region1: #{cnn_decoder_forward.1} parent=0
    #allocation2 [shape = 'u8[32768]{0}', space=vmem, size = 0x8000, scoped, tag = 'input window, operand 1, single buffered']
    #allocation3 [shape = 's32[1]{0}', space=sflag, size = 0x4, scoped, tag = 'scoped memory for cnn_decoder_forward.1']
    #allocation4 [shape = 'u8[104448]{0}', space=vmem, size = 0x19800, scoped, tag = 'input window, operand 3, single buffered']
    #allocation5 [shape = 's32[1]{0}', space=sflag, size = 0x4, scoped, tag = 'scoped memory for cnn_decoder_forward.1']
    %9 = vsyncpa [#allocation3], 0
    %10 = vsyncpa [#allocation5], 0
    // Predicated region
    $region2: #{cnn_decoder_forward.1} parent=1 // pred_check
      _
    $region3: #{cnn_decoder_forward.1} parent=1 // pred_check_branch
      %12 = sbr.rel (0) target = $region5
    $region4: #{cnn_decoder_forward.1} parent=1 // pred_region
      _
    $region5: #{cnn_decoder_forward.1} parent=1 // pred_fallthru
      _
    // Predicated region
    $region6: #{cnn_decoder_forward.1} parent=1 // pred_check
      _
    $region7: #{cnn_decoder_forward.1} parent=1 // pred_check_branch
      %14 = sbr.rel (0) target = $region9
    $region8: #{cnn_decoder_forward.1} parent=1 // pred_region
      %s16 = ssub.s32 1024, 1024
      %17 = vsyncadd [#allocation3], %s16
      %s18 = sshll.u32 [#allocation2], 4
      %s19 = int_to_ptr.vmem [resolvable:$true] %s18
      %24 = dma.hbm_to_vmem [thread:$0]  %s1, 1024, %s19, [#allocation3], 256, 256, 16
    $region9: #{cnn_decoder_forward.1} parent=1 // pred_fallthru
      _
    // Predicated region
    $region10: #{cnn_decoder_forward.1} parent=1 // pred_check
      _
    $region11: #{cnn_decoder_forward.1} parent=1 // pred_check_branch
      %26 = sbr.rel (0) target = $region13
    $region12: #{cnn_decoder_forward.1} parent=1 // pred_region
      _
    $region13: #{cnn_decoder_forward.1} parent=1 // pred_fallthru
      _
    // Predicated region
    $region14: #{cnn_decoder_forward.1} parent=1 // pred_check
      _
    $region15: #{cnn_decoder_forward.1} parent=1 // pred_check_branch
      %28 = sbr.rel (0) target = $region17
    $region16: #{cnn_decoder_forward.1} parent=1 // pred_region
      %s30 = ssub.s32 3264, 3264
      %31 = vsyncadd [#allocation5], %s30
      %s32 = sshll.u32 [#allocation4], 4
      %s33 = int_to_ptr.vmem [resolvable:$true] %s32
      %38 = dma.hbm_to_vmem [thread:$0]  %s3, 3264, %s33, [#allocation5], 64, 64, 4
    $region17: #{cnn_decoder_forward.1} parent=1 // pred_fallthru
      _
    // Predicated region
    $region18: #{cnn_decoder_forward.1} parent=1 // pred_check
      _
    $region19: #{cnn_decoder_forward.1} parent=1 // pred_check_branch
      %40 = sbr.rel (0) target = $region21
    $region20: #{cnn_decoder_forward.1} parent=1 // pred_region
      %41 = dma.done [#allocation3], 1024
    $region21: #{cnn_decoder_forward.1} parent=1 // pred_fallthru
      _
    // Predicated region
    $region22: #{cnn_decoder_forward.1} parent=1 // pred_check
      _
    $region23: #{cnn_decoder_forward.1} parent=1 // pred_check_branch
      %43 = sbr.rel (0) target = $region25
    $region24: #{cnn_decoder_forward.1} parent=1 // pred_region
      %44 = dma.done [#allocation5], 3264
    $region25: #{cnn_decoder_forward.1} parent=1 // pred_fallthru
      _
    %v46 = vld [vmem:[%s0] sm:$0xff]
    %v47 = vpack.c.bf16 %v46, %v46
    %v48 = vld [vmem:[#allocation2] sm:$0xff]
    %v49 = vld [vmem:[#allocation2 + $0x8] sm:$0xff]
    %v50 = vld [vmem:[#allocation2 + $0x10] sm:$0xff]
    %v51 = vld [vmem:[#allocation2 + $0x18] sm:$0xff]
    %v52 = vld [vmem:[#allocation2 + $0x20] sm:$0xff]
    %v53 = vld [vmem:[#allocation2 + $0x28] sm:$0xff]
    %v54 = vld [vmem:[#allocation2 + $0x30] sm:$0xff]
    %v55 = vld [vmem:[#allocation2 + $0x38] sm:$0xff]
    %v56 = vld [vmem:[%s2] sm:$0xf]
    %v58 = vlaneseq
    %v59 = vshrl.u32 %v58, 7
    %v60 = vsub.s32 0, %v59
    %v61 = vrot.slane %v56, %v60
    %v62 = vlaneseq
    %v63 = vshrl.u32 %v62, 7
    %v64 = vsub.s32 1, %v63
    %v65 = vrot.slane %v56, %v64
    %v66 = vlaneseq
    %v67 = vshrl.u32 %v66, 7
    %v68 = vsub.s32 2, %v67
    %v69 = vrot.slane %v56, %v68
    %v70 = vlaneseq
    %v71 = vshrl.u32 %v70, 7
    %v72 = vsub.s32 3, %v71
    %v73 = vrot.slane %v56, %v72
    %v86 = vunpack.c.l.b16 %v48
    %v87 = vunpack.c.h.b16 %v48
    %v88 = vunpack.c.l.b16 %v49
    %v89 = vunpack.c.h.b16 %v49
    %v90 = vunpack.c.l.b16 %v50
    %v91 = vunpack.c.h.b16 %v50
    %v92 = vunpack.c.l.b16 %v51
    %v93 = vunpack.c.h.b16 %v51
    %v94 = vunpack.c.l.b16 %v52
    %v95 = vunpack.c.h.b16 %v52
    %v96 = vunpack.c.l.b16 %v53
    %v97 = vunpack.c.h.b16 %v53
    %v98 = vunpack.c.l.b16 %v54
    %v99 = vunpack.c.h.b16 %v54
    %v100 = vunpack.c.l.b16 %v55
    %v101 = vunpack.c.h.b16 %v55
    %v102 = vpack.c.b16 %v90, %v86
    %v103 = vpack.c.b16 %v91, %v87
    %v104 = vpack.c.b16 %v92, %v88
    %v105 = vpack.c.b16 %v93, %v89
    %v106 = vpack.c.b16 %v98, %v94
    %v107 = vpack.c.b16 %v99, %v95
    %v108 = vpack.c.b16 %v100, %v96
    %v109 = vpack.c.b16 %v101, %v97
    %vm118 = vcmask 261120
    %v120 = vsel %vm118, %v47, 0
    %122 = vmatprep.subr.bf16.mxu0 %v103
    %123 = vmatpush1.bf16.msra.mxu0 %v102
    %124 = vmatprep.subr.bf16.mxu0 %v107
    %125 = vmatpush1.bf16.msra.mxu0 %v106
    %126 = vmatprep.subr.bf16.mxu0 0
    %127 = vmatpush1.bf16.msra.mxu0 0
    %128 = vmatprep.subr.bf16.mxu0 0
    %129 = vmatpush1.bf16.msra.mxu0 0
    %130 = vmatprep.subr.bf16.mxu0 0
    %131 = vmatpush1.bf16.msra.mxu0 0
    %132 = vmatprep.subr.bf16.mxu0 0
    %133 = vmatpush1.bf16.msra.mxu0 0
    %134 = vmatprep.subr.bf16.mxu0 0
    %135 = vmatpush1.bf16.msra.mxu0 0
    %136 = vmatprep.subr.bf16.mxu0 0
    %137 = vmatpush1.bf16.msra.mxu0 0
    %138 = vmatprep.subr.bf16.mxu0 0
    %139 = vmatpush1.bf16.msra.mxu0 0
    %140 = vmatprep.subr.bf16.mxu0 0
    %141 = vmatpush1.bf16.msra.mxu0 0
    %142 = vmatprep.subr.bf16.mxu0 0
    %143 = vmatpush1.bf16.msra.mxu0 0
    %144 = vmatprep.subr.bf16.mxu0 0
    %145 = vmatpush1.bf16.msra.mxu0 0
    %146 = vmatprep.subr.bf16.mxu0 0
    %147 = vmatpush1.bf16.msra.mxu0 0
    %148 = vmatprep.subr.bf16.mxu0 0
    %149 = vmatpush1.bf16.msra.mxu0 0
    %150 = vmatprep.subr.bf16.mxu0 0
    %151 = vmatpush1.bf16.msra.mxu0 0
    %152 = vmatprep.subr.bf16.mxu0 0
    %153 = vmatpush1.bf16.msra.mxu0 0
    %154 = vmatprep.mubr.bf16.mxu0 0
    %155 = vmatmul.mubr.bf16.gmra.mrb[0].mxu0 %v120
    %v156 = vpop.f32.mrb[0].mxu0
    %v157 = vadd.f32 %v61, %v156
    %v158 = vpop.f32.mrb[0].mxu0
    %v159 = vadd.f32 %v65, %v158
    %v160 = vpop.f32.mrb[0].mxu0
    %v161 = vpop.f32.mrb[0].mxu0
    %162 = vdwg.mxu0
    %163 = vmatprep.subr.bf16.mxu0 %v105
    %164 = vmatpush1.bf16.msra.mxu0 %v104
    %165 = vmatprep.subr.bf16.mxu0 %v109
    %166 = vmatpush1.bf16.msra.mxu0 %v108
    %167 = vmatprep.subr.bf16.mxu0 0
    %168 = vmatpush1.bf16.msra.mxu0 0
    %169 = vmatprep.subr.bf16.mxu0 0
    %170 = vmatpush1.bf16.msra.mxu0 0
    %171 = vmatprep.subr.bf16.mxu0 0
    %172 = vmatpush1.bf16.msra.mxu0 0
    %173 = vmatprep.subr.bf16.mxu0 0
    %174 = vmatpush1.bf16.msra.mxu0 0
    %175 = vmatprep.subr.bf16.mxu0 0
    %176 = vmatpush1.bf16.msra.mxu0 0
    %177 = vmatprep.subr.bf16.mxu0 0
    %178 = vmatpush1.bf16.msra.mxu0 0
    %179 = vmatprep.subr.bf16.mxu0 0
    %180 = vmatpush1.bf16.msra.mxu0 0
    %181 = vmatprep.subr.bf16.mxu0 0
    %182 = vmatpush1.bf16.msra.mxu0 0
    %183 = vmatprep.subr.bf16.mxu0 0
    %184 = vmatpush1.bf16.msra.mxu0 0
    %185 = vmatprep.subr.bf16.mxu0 0
    %186 = vmatpush1.bf16.msra.mxu0 0
    %187 = vmatprep.subr.bf16.mxu0 0
    %188 = vmatpush1.bf16.msra.mxu0 0
    %189 = vmatprep.subr.bf16.mxu0 0
    %190 = vmatpush1.bf16.msra.mxu0 0
    %191 = vmatprep.subr.bf16.mxu0 0
    %192 = vmatpush1.bf16.msra.mxu0 0
    %193 = vmatprep.subr.bf16.mxu0 0
    %194 = vmatpush1.bf16.msra.mxu0 0
    %195 = vmatprep.mubr.bf16.mxu0 0
    %196 = vmatmul.mubr.bf16.gmra.mrb[0].mxu0 %v120
    %v197 = vpop.f32.mrb[0].mxu0
    %v198 = vadd.f32 %v69, %v197
    %v199 = vpop.f32.mrb[0].mxu0
    %v200 = vadd.f32 %v73, %v199
    %v201 = vpop.f32.mrb[0].mxu0
    %v202 = vpop.f32.mrb[0].mxu0
    %203 = vdwg.mxu0
    %v204 = vmax.f32 %v157, 0.0
    %v205 = vmax.f32 %v159, 0.0
    %v206 = vmax.f32 %v198, 0.0
    %v207 = vmax.f32 %v200, 0.0
    %v208 = vpack.c.bf16 %v204, %v204
    %v209 = vpack.c.bf16 %v205, %v205
    %v210 = vpack.c.bf16 %v206, %v206
    %v211 = vpack.c.bf16 %v207, %v207
    %v212 = vld [vmem:[#allocation4] sm:$0xf]
    %v213 = vld [vmem:[#allocation4 + $0x4] sm:$0xf]
    %v214 = vld [vmem:[#allocation4 + $0x8] sm:$0xf]
    %v215 = vld [vmem:[#allocation4 + $0xc] sm:$0xf]
    %v216 = vld [vmem:[#allocation4 + $0x10] sm:$0xf]
    %v217 = vld [vmem:[#allocation4 + $0x14] sm:$0xf]
    %v218 = vld [vmem:[#allocation4 + $0x18] sm:$0xf]
    %v219 = vld [vmem:[#allocation4 + $0x1c] sm:$0xf]
    %v220 = vld [vmem:[#allocation4 + $0x20] sm:$0xf]
    %v221 = vld [vmem:[#allocation4 + $0x24] sm:$0xf]
    %v222 = vld [vmem:[#allocation4 + $0x28] sm:$0xf]
    %v223 = vld [vmem:[#allocation4 + $0x2c] sm:$0xf]
    %v224 = vld [vmem:[#allocation4 + $0x30] sm:$0xf]
    %v225 = vld [vmem:[#allocation4 + $0x34] sm:$0xf]
    %v226 = vld [vmem:[#allocation4 + $0x38] sm:$0xf]
    %v227 = vld [vmem:[#allocation4 + $0x3c] sm:$0xf]
    %v228 = vld [vmem:[#allocation4 + $0x40] sm:$0xf]
    %v229 = vld [vmem:[#allocation4 + $0x44] sm:$0xf]
    %v230 = vld [vmem:[#allocation4 + $0x48] sm:$0xf]
    %v231 = vld [vmem:[#allocation4 + $0x4c] sm:$0xf]
    %v232 = vld [vmem:[#allocation4 + $0x50] sm:$0xf]
    %v233 = vld [vmem:[#allocation4 + $0x54] sm:$0xf]
    %v234 = vld [vmem:[#allocation4 + $0x58] sm:$0xf]
    %v235 = vld [vmem:[#allocation4 + $0x5c] sm:$0xf]
    %v236 = vld [vmem:[#allocation4 + $0x60] sm:$0xf]
    %v237 = vld [vmem:[#allocation4 + $0x64] sm:$0xf]
    %v238 = vld [vmem:[#allocation4 + $0x68] sm:$0xf]
    %v239 = vld [vmem:[#allocation4 + $0x6c] sm:$0xf]
    %v240 = vld [vmem:[#allocation4 + $0x70] sm:$0xf]
    %v241 = vld [vmem:[#allocation4 + $0x74] sm:$0xf]
    %v242 = vld [vmem:[#allocation4 + $0x78] sm:$0xf]
    %v243 = vld [vmem:[#allocation4 + $0x7c] sm:$0xf]
    %v244 = vld [vmem:[#allocation4 + $0x80] sm:$0xf]
    %v245 = vld [vmem:[#allocation4 + $0x84] sm:$0xf]
    %v246 = vld [vmem:[#allocation4 + $0x88] sm:$0xf]
    %v247 = vld [vmem:[#allocation4 + $0x8c] sm:$0xf]
    %v248 = vld [vmem:[#allocation4 + $0x90] sm:$0xf]
    %v249 = vld [vmem:[#allocation4 + $0x94] sm:$0xf]
    %v250 = vld [vmem:[#allocation4 + $0x98] sm:$0xf]
    %v251 = vld [vmem:[#allocation4 + $0x9c] sm:$0xf]
    %v252 = vld [vmem:[#allocation4 + $0xa0] sm:$0xf]
    %v253 = vld [vmem:[#allocation4 + $0xa4] sm:$0xf]
    %v254 = vld [vmem:[#allocation4 + $0xa8] sm:$0xf]
    %v255 = vld [vmem:[#allocation4 + $0xac] sm:$0xf]
    %v256 = vld [vmem:[#allocation4 + $0xb0] sm:$0xf]
    %v257 = vld [vmem:[#allocation4 + $0xb4] sm:$0xf]
    %v258 = vld [vmem:[#allocation4 + $0xb8] sm:$0xf]
    %v259 = vld [vmem:[#allocation4 + $0xbc] sm:$0xf]
    %v260 = vld [vmem:[#allocation4 + $0xc0] sm:$0xf]
    %v261 = vld [vmem:[#allocation4 + $0xc4] sm:$0xf]
    %v262 = vld [vmem:[#allocation4 + $0xc8] sm:$0xf]
    %v314 = vunpack.c.l.b16 %v212
    %v315 = vunpack.c.l.b16 %v213
    %v316 = vunpack.c.l.b16 %v214
    %v317 = vunpack.c.l.b16 %v215
    %v318 = vunpack.c.l.b16 %v216
    %v319 = vunpack.c.l.b16 %v217
    %v320 = vunpack.c.l.b16 %v218
    %v321 = vunpack.c.l.b16 %v219
    %v322 = vunpack.c.l.b16 %v220
    %v323 = vunpack.c.l.b16 %v221
    %v324 = vunpack.c.l.b16 %v222
    %v325 = vunpack.c.l.b16 %v223
    %v326 = vunpack.c.l.b16 %v224
    %v327 = vunpack.c.l.b16 %v225
    %v328 = vunpack.c.l.b16 %v226
    %v329 = vunpack.c.l.b16 %v227
    %v330 = vunpack.c.l.b16 %v228
    %v331 = vunpack.c.l.b16 %v229
    %v332 = vunpack.c.l.b16 %v230
    %v333 = vunpack.c.l.b16 %v231
    %v334 = vunpack.c.l.b16 %v232
    %v335 = vunpack.c.l.b16 %v233
    %v336 = vunpack.c.l.b16 %v234
    %v337 = vunpack.c.l.b16 %v235
    %v338 = vunpack.c.l.b16 %v236
    %v339 = vunpack.c.l.b16 %v237
    %v340 = vunpack.c.l.b16 %v238
    %v341 = vunpack.c.l.b16 %v239
    %v342 = vunpack.c.l.b16 %v240
    %v343 = vunpack.c.l.b16 %v241
    %v344 = vunpack.c.l.b16 %v242
    %v345 = vunpack.c.l.b16 %v243
    %v346 = vunpack.c.l.b16 %v244
    %v347 = vunpack.c.l.b16 %v245
    %v348 = vunpack.c.l.b16 %v246
    %v349 = vunpack.c.l.b16 %v247
    %v350 = vunpack.c.l.b16 %v248
    %v351 = vunpack.c.l.b16 %v249
    %v352 = vunpack.c.l.b16 %v250
    %v353 = vunpack.c.l.b16 %v251
    %v354 = vunpack.c.l.b16 %v252
    %v355 = vunpack.c.l.b16 %v253
    %v356 = vunpack.c.l.b16 %v254
    %v357 = vunpack.c.l.b16 %v255
    %v358 = vunpack.c.l.b16 %v256
    %v359 = vunpack.c.l.b16 %v257
    %v360 = vunpack.c.l.b16 %v258
    %v361 = vunpack.c.l.b16 %v259
    %v362 = vunpack.c.l.b16 %v260
    %v363 = vunpack.c.l.b16 %v261
    %v364 = vunpack.c.l.b16 %v262
    %v365 = vpack.c.b16 %v315, %v314
    %v366 = vpack.c.b16 %v317, %v316
    %v367 = vpack.c.b16 %v319, %v318
    %v368 = vpack.c.b16 %v321, %v320
    %v369 = vpack.c.b16 %v323, %v322
    %v370 = vpack.c.b16 %v325, %v324
    %v371 = vpack.c.b16 %v327, %v326
    %v372 = vpack.c.b16 %v329, %v328
    %v373 = vpack.c.b16 %v331, %v330
    %v374 = vpack.c.b16 %v333, %v332
    %v375 = vpack.c.b16 %v335, %v334
    %v376 = vpack.c.b16 %v337, %v336
    %v377 = vpack.c.b16 %v339, %v338
    %v378 = vpack.c.b16 %v341, %v340
    %v379 = vpack.c.b16 %v343, %v342
    %v380 = vpack.c.b16 %v345, %v344
    %v381 = vpack.c.b16 %v347, %v346
    %v382 = vpack.c.b16 %v349, %v348
    %v383 = vpack.c.b16 %v351, %v350
    %v384 = vpack.c.b16 %v353, %v352
    %v385 = vpack.c.b16 %v355, %v354
    %v386 = vpack.c.b16 %v357, %v356
    %v387 = vpack.c.b16 %v359, %v358
    %v388 = vpack.c.b16 %v361, %v360
    %v389 = vpack.c.b16 %v363, %v362
    %v390 = vpack.c.b16 %v364, %v364
    %vm416 = vcmask 195584
    %v418 = vsel %vm416, %v211, 0
    %vm420 = vcmask 1043456
    %v422 = vsel %vm420, %v390, 0
    %424 = vmatprep.subr.bf16.mxu0 0
    %425 = vmatpush1.bf16.msra.mxu0 %v365
    %426 = vmatprep.subr.bf16.mxu0 0
    %427 = vmatpush1.bf16.msra.mxu0 %v366
    %428 = vmatprep.subr.bf16.mxu0 0
    %429 = vmatpush1.bf16.msra.mxu0 %v367
    %430 = vmatprep.subr.bf16.mxu0 0
    %431 = vmatpush1.bf16.msra.mxu0 %v368
    %432 = vmatprep.subr.bf16.mxu0 0
    %433 = vmatpush1.bf16.msra.mxu0 %v369
    %434 = vmatprep.subr.bf16.mxu0 0
    %435 = vmatpush1.bf16.msra.mxu0 %v370
    %436 = vmatprep.subr.bf16.mxu0 0
    %437 = vmatpush1.bf16.msra.mxu0 %v371
    %438 = vmatprep.subr.bf16.mxu0 0
    %439 = vmatpush1.bf16.msra.mxu0 %v372
    %440 = vmatprep.subr.bf16.mxu0 0
    %441 = vmatpush1.bf16.msra.mxu0 %v373
    %442 = vmatprep.subr.bf16.mxu0 0
    %443 = vmatpush1.bf16.msra.mxu0 %v374
    %444 = vmatprep.subr.bf16.mxu0 0
    %445 = vmatpush1.bf16.msra.mxu0 %v375
    %446 = vmatprep.subr.bf16.mxu0 0
    %447 = vmatpush1.bf16.msra.mxu0 %v376
    %448 = vmatprep.subr.bf16.mxu0 0
    %449 = vmatpush1.bf16.msra.mxu0 %v377
    %450 = vmatprep.subr.bf16.mxu0 0
    %451 = vmatpush1.bf16.msra.mxu0 %v378
    %452 = vmatprep.subr.bf16.mxu0 0
    %453 = vmatpush1.bf16.msra.mxu0 %v379
    %454 = vmatprep.subr.bf16.mxu0 0
    %455 = vmatpush1.bf16.msra.mxu0 %v380
    %456 = vmatprep.mubr.bf16.mxu0 %v209
    %457 = vmatmul.mubr.bf16.gmra.mrb[0].mxu0 %v208
    %v458 = vpop.f32.mrb[0].mxu0
    %v459 = vadd.f32 0.0, %v458
    %v460 = vpop.f32.mrb[0].mxu0
    %v461 = vpop.f32.mrb[0].mxu0
    %v462 = vpop.f32.mrb[0].mxu0
    %463 = vdwg.mxu0
    %464 = vmatprep.subr.bf16.mxu0 0
    %465 = vmatpush1.bf16.msra.mxu0 %v381
    %466 = vmatprep.subr.bf16.mxu0 0
    %467 = vmatpush1.bf16.msra.mxu0 %v382
    %468 = vmatprep.subr.bf16.mxu0 0
    %469 = vmatpush1.bf16.msra.mxu0 %v383
    %470 = vmatprep.subr.bf16.mxu0 0
    %471 = vmatpush1.bf16.msra.mxu0 %v384
    %472 = vmatprep.subr.bf16.mxu0 0
    %473 = vmatpush1.bf16.msra.mxu0 %v385
    %474 = vmatprep.subr.bf16.mxu0 0
    %475 = vmatpush1.bf16.msra.mxu0 %v386
    %476 = vmatprep.subr.bf16.mxu0 0
    %477 = vmatpush1.bf16.msra.mxu0 %v387
    %478 = vmatprep.subr.bf16.mxu0 0
    %479 = vmatpush1.bf16.msra.mxu0 %v388
    %480 = vmatprep.subr.bf16.mxu0 0
    %481 = vmatpush1.bf16.msra.mxu0 %v389
    %482 = vmatprep.subr.bf16.mxu0 0
    %483 = vmatpush1.bf16.msra.mxu0 %v422
    %484 = vmatprep.subr.bf16.mxu0 0
    %485 = vmatpush1.bf16.msra.mxu0 0
    %486 = vmatprep.subr.bf16.mxu0 0
    %487 = vmatpush1.bf16.msra.mxu0 0
    %488 = vmatprep.subr.bf16.mxu0 0
    %489 = vmatpush1.bf16.msra.mxu0 0
    %490 = vmatprep.subr.bf16.mxu0 0
    %491 = vmatpush1.bf16.msra.mxu0 0
    %492 = vmatprep.subr.bf16.mxu0 0
    %493 = vmatpush1.bf16.msra.mxu0 0
    %494 = vmatprep.subr.bf16.mxu0 0
    %495 = vmatpush1.bf16.msra.mxu0 0
    %496 = vmatprep.mubr.bf16.mxu0 %v418
    %497 = vmatmul.mubr.bf16.gmra.mrb[0].mxu0 %v210
    %v498 = vpop.f32.mrb[0].mxu0
    %v499 = vadd.f32 %v459, %v498
    %v500 = vpop.f32.mrb[0].mxu0
    %v501 = vpop.f32.mrb[0].mxu0
    %v502 = vpop.f32.mrb[0].mxu0
    %503 = vdwg.mxu0
    %504 = vst [vmem:[%s4] sm:$0xff] %v499
    // Predicated region
    $region26: #{cnn_decoder_forward.1} parent=1 // pred_check
      _
    $region27: #{cnn_decoder_forward.1} parent=1 // pred_check_branch
      %506 = sbr.rel (0) target = $region29
    $region28: #{cnn_decoder_forward.1} parent=1 // pred_region
      _
    $region29: #{cnn_decoder_forward.1} parent=1 // pred_fallthru
      _
    // Predicated region
    $region30: #{cnn_decoder_forward.1} parent=1 // pred_check
      _
    $region31: #{cnn_decoder_forward.1} parent=1 // pred_check_branch
      %508 = sbr.rel (0) target = $region33
    $region32: #{cnn_decoder_forward.1} parent=1 // pred_region
      _
    $region33: #{cnn_decoder_forward.1} parent=1 // pred_fallthru
      _
    %509 = vsyncpa [#allocation3], 1
    %510 = vsyncpa [#allocation5], 1

</llo_original>
